<compile_context>
chip_gen: v6e
topology: v6e:2x2x1
jax: 0.10.0
libtpu: 0.0.40
codegen_flags: <defaults>
</compile_context>

<pallas_src>
import functools

import jax
import jax.numpy as jnp
from jax.experimental import pallas as pl
from jax.experimental.pallas import tpu as pltpu

N_CLASSES = 15
SMOOTHING = 0.1
CONFIDENCE = 1.0 - SMOOTHING
_OFF_VAL = SMOOTHING / (N_CLASSES - 1)


def _round_up(x, m):
    return ((x + m - 1) // m) * m


def _label_smoothing_loss_kernel(batch_ref, logits_ref, target_ref, out_ref,
                                 acc_ref, *, tile_b):
    i = pl.program_id(0)

    @pl.when(i == 0)
    def _():
        acc_ref[...] = jnp.zeros_like(acc_ref)

    # Natural-layout (TB, C) tile -> f32 -> lane-dense (C, TB): classes on the
    # sublane axis, batch on the 128-wide lane axis.
    # TODO(synk): for bf16 callers on v6e/v7x, transpose in bf16 and upcast after
    # (halves XLU traffic); kept uniform f32 here for v5e robustness.
    x = logits_ref[...].astype(jnp.float32)                        # (TB, C)
    xt = x.T                                                       # (C, TB)
    tgt = target_ref[...]                                          # (1, TB) int32

    # Numerically stable log-softmax pieces along the class (sublane) axis.
    m = jnp.max(xt, axis=0, keepdims=True)                         # (1, TB)
    z = xt - m
    lse = jnp.log(jnp.sum(jnp.exp(z), axis=0, keepdims=True))      # (1, TB)

    # Fused label-smoothing loss: loss_i = lse_i - sum_c w_c(i) * z_{c,i} with
    # w = CONFIDENCE at the target class and SMOOTHING/(C-1) elsewhere; since
    # sum_c w_c == 1 exactly, the lse coefficient is 1 and only one class-axis
    # reduction is needed.
    cls = jax.lax.broadcasted_iota(jnp.int32, (N_CLASSES, 1), 0)   # (C, 1)
    w = jnp.where(cls == tgt, CONFIDENCE, _OFF_VAL)                # (C, TB)
    loss_cols = lse - jnp.sum(w * z, axis=0, keepdims=True)        # (1, TB)

    # Valid columns in this tile (true batch size lives in SMEM).
    rem = batch_ref[0] - i * tile_b

    @pl.when(rem >= tile_b)          # full tile: accumulate unmasked
    def _():
        acc_ref[...] += jnp.sum(loss_cols, axis=1, keepdims=True)

    @pl.when(rem < tile_b)           # ragged last tile: mask padded columns
    def _():
        col = jax.lax.broadcasted_iota(jnp.int32, loss_cols.shape, 1)
        masked = jnp.where(col < rem, loss_cols, 0.0)
        acc_ref[...] += jnp.sum(masked, axis=1, keepdims=True)

    @pl.when(i == pl.num_programs(0) - 1)
    def _():
        out_ref[...] = acc_ref[...] / batch_ref[0].astype(jnp.float32)


def criterion_pallas(logits, target, *, tile_b=8192):
    """logits: (B, C) float32/bf16, target: (B,) int -> scalar float32 loss."""
    B, C = logits.shape
    if C != N_CLASSES:
        raise ValueError(f"expected {N_CLASSES} classes, got {C}")

    # Batch tile: a multiple of 128 that does not exceed B (lane-dense after the
    # in-kernel transpose and a legal minor block dim for the (1, B) targets);
    # for tiny batches use a single exact (B, C) block.
    tile_b = _round_up(max(int(tile_b), 128), 128)
    if B >= 128:
        TB = min(tile_b, (B // 128) * 128)
    else:
        TB = B
    n_tiles = pl.cdiv(B, TB)

    target2d = target.astype(jnp.int32).reshape(1, B)      # batch on lanes
    batch = jnp.full((1,), B, dtype=jnp.int32)             # SMEM scalar prefetch

    kernel = functools.partial(_label_smoothing_loss_kernel, tile_b=TB)

    # TODO(synk): on v7x a leading "parallel" grid axis of size 2 with per-core
    # partial sums would use both TensorCores; kept single-axis here because the
    # carried (1, 1) accumulator keeps the kernel simple and robust.
    out = pl.pallas_call(
        kernel,
        out_shape=jax.ShapeDtypeStruct((1, 1), jnp.float32),
        grid_spec=pltpu.PrefetchScalarGridSpec(
            num_scalar_prefetch=1,
            grid=(n_tiles,),
            in_specs=[
                pl.BlockSpec((TB, C), lambda i, b: (i, 0)),
                pl.BlockSpec((1, TB), lambda i, b: (0, i)),
            ],
            out_specs=pl.BlockSpec((1, 1), lambda i, b: (0, 0)),
            scratch_shapes=[pltpu.VMEM((1, 1), jnp.float32)],
        ),
        compiler_params=pltpu.CompilerParams(
            dimension_semantics=("arbitrary",),
            vmem_limit_bytes=32 * 1024 * 1024,
        ),
    )(batch, logits, target2d)
    return out[0, 0]


def criterion_reference(logits, target):
    """Plain-JAX reference mirroring the PyTorch LabelSmoothingLoss."""
    logp = jax.nn.log_softmax(logits.astype(jnp.float32), axis=-1)
    B, C = logits.shape
    true_dist = jnp.full((B, C), SMOOTHING / (C - 1), dtype=jnp.float32)
    true_dist = true_dist.at[jnp.arange(B), target].set(CONFIDENCE)
    return jnp.mean(jnp.sum(-true_dist * logp, axis=-1))


if __name__ == "__main__":
    key = jax.random.PRNGKey(0)
    k1, k2, k3, k4 = jax.random.split(key, 4)

    # Small case matching the module: batch=8, n_classes=15 (single exact tile).
    B = 8
    logits = jax.random.normal(k1, (B, N_CLASSES), dtype=jnp.float32)
    target = jax.random.randint(k2, (B,), 0, N_CLASSES, dtype=jnp.int32)
    loss = criterion_pallas(logits, target)
    jax.block_until_ready(loss)
    ref = criterion_reference(logits, target)
    assert jnp.allclose(loss, ref, atol=1e-4, rtol=1e-4), (loss, ref)

    # bf16 input with an explicit small tile: B=300 / tile_b=128 -> 3 grid steps
    # with a ragged last tile (44 valid columns) -> exercises the in-kernel mask.
    B2 = 300
    logits2 = jax.random.normal(k3, (B2, N_CLASSES),
                                dtype=jnp.float32).astype(jnp.bfloat16)
    target2 = jax.random.randint(k4, (B2,), 0, N_CLASSES, dtype=jnp.int32)
    loss2 = criterion_pallas(logits2, target2, tile_b=128)
    jax.block_until_ready(loss2)
    ref2 = criterion_reference(logits2.astype(jnp.float32), target2)
    assert jnp.allclose(loss2, ref2, atol=1e-4, rtol=1e-4), (loss2, ref2)

    # f32 input with the default tile: B=300 -> TB=256, 2 grid steps, ragged tail.
    loss3 = criterion_pallas(logits2.astype(jnp.float32), target2)
    jax.block_until_ready(loss3)
    assert jnp.allclose(loss3, ref2, atol=1e-4, rtol=1e-4), (loss3, ref2)

    print("KERNEL_OK")
</pallas_src>

<mosaic_0001>
module attributes {stable_mosaic.version = 11 : i64} {
  func.func @_label_smoothing_loss_kernel(%arg0: i32, %arg1: memref<1xi32, #tpu.memory_space<smem>>, %arg2: memref<8x15xf32, #tpu.memory_space<vmem>>, %arg3: memref<1x8xi32, #tpu.memory_space<vmem>>, %arg4: memref<1x1xf32, #tpu.memory_space<vmem>>, %arg5: memref<1x1xf32, #tpu.memory_space<vmem>>) attributes {dimension_semantics = [#tpu.dimension_semantics<arbitrary>], iteration_bounds = array<i64: 1>, scalar_prefetch = 1 : i64, scratch_operands = 1 : i64, tpu.core_type = #tpu.core_type<tc>, window_params = [{transform_indices = @transform_0, window_bounds = array<i64: 8, 15>}, {transform_indices = @transform_1, window_bounds = array<i64: 1, 8>}, {pipeline_mode = #tpu.pipeline_mode<synchronous>, transform_indices = @transform_2, window_bounds = array<i64: 1, 1>}]} {
    %c0_i32 = arith.constant 0 : i32
    %0 = arith.cmpi eq, %arg0, %c0_i32 : i32
    %1 = arith.extui %0 : i1 to i32
    %c0_i32_0 = arith.constant 0 : i32
    %2 = arith.cmpi ne, %1, %c0_i32_0 : i32
    scf.if %2 {
      %cst_15 = arith.constant 0.000000e+00 : f32
      %37 = vector.broadcast %cst_15 : f32 to vector<1x1xf32>
      %c0_16 = arith.constant 0 : index
      %c0_17 = arith.constant 0 : index
      %38 = vector.load %arg5[%c0_16, %c0_17] : memref<1x1xf32, #tpu.memory_space<vmem>>, vector<1x1xf32>
      tpu.vector_store %arg5[%c0_16, %c0_17], %37 {strides = array<i32>} : memref<1x1xf32, #tpu.memory_space<vmem>>, vector<1x1xf32>,
    } else {
    }
    %c0 = arith.constant 0 : index
    %c0_1 = arith.constant 0 : index
    %3 = vector.load %arg2[%c0, %c0_1] : memref<8x15xf32, #tpu.memory_space<vmem>>, vector<8x15xf32>
    %4 = tpu.transpose %3, [1, 0] : vector<8x15xf32> -> vector<15x8xf32>
    %c0_2 = arith.constant 0 : index
    %c0_3 = arith.constant 0 : index
    %5 = vector.load %arg3[%c0_2, %c0_3] : memref<1x8xi32, #tpu.memory_space<vmem>>, vector<1x8xi32>
    %cst = arith.constant dense<0xFF800000> : vector<8xf32>
    %6 = vector.multi_reduction <maximumf>, %4, %cst [0] : vector<15x8xf32> to vector<8xf32>
    %7 = vector.shape_cast %6 : vector<8xf32> to vector<1x8xf32>
    %8 = vector.broadcast %7 : vector<1x8xf32> to vector<15x8xf32>
    %9 = arith.subf %4, %8 : vector<15x8xf32>
    %10 = math.exp %9 : vector<15x8xf32>
    %cst_4 = arith.constant dense<0.000000e+00> : vector<8xf32>
    %11 = vector.multi_reduction <add>, %10, %cst_4 [0] : vector<15x8xf32> to vector<8xf32>
    %12 = vector.shape_cast %11 : vector<8xf32> to vector<1x8xf32>
    %13 = math.log %12 : vector<1x8xf32>
    %14 = tpu.iota {dimensions = array<i32: 0>} : vector<15x1xi32>
    %15 = vector.broadcast %14 : vector<15x1xi32> to vector<15x8xi32>
    %16 = vector.broadcast %5 : vector<1x8xi32> to vector<15x8xi32>
    %17 = arith.cmpi eq, %15, %16 : vector<15x8xi32>
    %cst_5 = arith.constant 0.899999976 : f32
    %cst_6 = arith.constant 0.00714285718 : f32
    %18 = vector.broadcast %cst_5 : f32 to vector<15x8xf32>
    %19 = vector.broadcast %cst_6 : f32 to vector<15x8xf32>
    %20 = arith.select %17, %18, %19 : vector<15x8xi1>, vector<15x8xf32>
    %21 = arith.mulf %20, %9 : vector<15x8xf32>
    %cst_7 = arith.constant dense<0.000000e+00> : vector<8xf32>
    %22 = vector.multi_reduction <add>, %21, %cst_7 [0] : vector<15x8xf32> to vector<8xf32>
    %23 = vector.shape_cast %22 : vector<8xf32> to vector<1x8xf32>
    %24 = arith.subf %13, %23 : vector<1x8xf32>
    %c0_8 = arith.constant 0 : index
    %25 = memref.load %arg1[%c0_8] : memref<1xi32, #tpu.memory_space<smem>>
    %c8_i32 = arith.constant 8 : i32
    %26 = arith.muli %arg0, %c8_i32 : i32
    %27 = arith.subi %25, %26 : i32
    %c8_i32_9 = arith.constant 8 : i32
    %28 = arith.cmpi sge, %27, %c8_i32_9 : i32
    %29 = arith.extui %28 : i1 to i32
    %c0_i32_10 = arith.constant 0 : i32
    %30 = arith.cmpi ne, %29, %c0_i32_10 : i32
    scf.if %30 {
      %c0_15 = arith.constant 0 : index
      %c0_16 = arith.constant 0 : index
      %37 = vector.load %arg5[%c0_15, %c0_16] : memref<1x1xf32, #tpu.memory_space<vmem>>, vector<1x1xf32>
      %cst_17 = arith.constant dense<0.000000e+00> : vector<1xf32>
      %38 = vector.multi_reduction <add>, %24, %cst_17 [1] : vector<1x8xf32> to vector<1xf32>
      %39 = vector.shape_cast %38 : vector<1xf32> to vector<1x1xf32>
      %40 = arith.addf %37, %39 : vector<1x1xf32>
      %c0_18 = arith.constant 0 : index
      %c0_19 = arith.constant 0 : index
      %41 = vector.load %arg5[%c0_18, %c0_19] : memref<1x1xf32, #tpu.memory_space<vmem>>, vector<1x1xf32>
      tpu.vector_store %arg5[%c0_18, %c0_19], %40 {strides = array<i32>} : memref<1x1xf32, #tpu.memory_space<vmem>>, vector<1x1xf32>,
    } else {
    }
    %c8_i32_11 = arith.constant 8 : i32
    %31 = arith.cmpi slt, %27, %c8_i32_11 : i32
    %32 = arith.extui %31 : i1 to i32
    %c0_i32_12 = arith.constant 0 : i32
    %33 = arith.cmpi ne, %32, %c0_i32_12 : i32
    scf.if %33 {
      %37 = tpu.iota {dimensions = array<i32: 1>} : vector<1x8xi32>
      %38 = vector.broadcast %27 : i32 to vector<1x8xi32>
      %39 = arith.cmpi slt, %37, %38 : vector<1x8xi32>
      %cst_15 = arith.constant 0.000000e+00 : f32
      %40 = vector.broadcast %cst_15 : f32 to vector<1x8xf32>
      %41 = arith.select %39, %24, %40 : vector<1x8xi1>, vector<1x8xf32>
      %c0_16 = arith.constant 0 : index
      %c0_17 = arith.constant 0 : index
      %42 = vector.load %arg5[%c0_16, %c0_17] : memref<1x1xf32, #tpu.memory_space<vmem>>, vector<1x1xf32>
      %cst_18 = arith.constant dense<0.000000e+00> : vector<1xf32>
      %43 = vector.multi_reduction <add>, %41, %cst_18 [1] : vector<1x8xf32> to vector<1xf32>
      %44 = vector.shape_cast %43 : vector<1xf32> to vector<1x1xf32>
      %45 = arith.addf %42, %44 : vector<1x1xf32>
      %c0_19 = arith.constant 0 : index
      %c0_20 = arith.constant 0 : index
      %46 = vector.load %arg5[%c0_19, %c0_20] : memref<1x1xf32, #tpu.memory_space<vmem>>, vector<1x1xf32>
      tpu.vector_store %arg5[%c0_19, %c0_20], %45 {strides = array<i32>} : memref<1x1xf32, #tpu.memory_space<vmem>>, vector<1x1xf32>,
    } else {
    }
    %c0_i32_13 = arith.constant 0 : i32
    %34 = arith.cmpi eq, %arg0, %c0_i32_13 : i32
    %35 = arith.extui %34 : i1 to i32
    %c0_i32_14 = arith.constant 0 : i32
    %36 = arith.cmpi ne, %35, %c0_i32_14 : i32
    scf.if %36 {
      %c0_15 = arith.constant 0 : index
      %c0_16 = arith.constant 0 : index
      %37 = vector.load %arg5[%c0_15, %c0_16] : memref<1x1xf32, #tpu.memory_space<vmem>>, vector<1x1xf32>
      %c0_17 = arith.constant 0 : index
      %38 = memref.load %arg1[%c0_17] : memref<1xi32, #tpu.memory_space<smem>>
      %39 = arith.sitofp %38 : i32 to f32
      %40 = vector.broadcast %39 : f32 to vector<1x1xf32>
      %41 = arith.divf %37, %40 : vector<1x1xf32>
      %c0_18 = arith.constant 0 : index
      %c0_19 = arith.constant 0 : index
      %42 = vector.load %arg4[%c0_18, %c0_19] : memref<1x1xf32, #tpu.memory_space<vmem>>, vector<1x1xf32>
      tpu.vector_store %arg4[%c0_18, %c0_19], %41 {strides = array<i32>} : memref<1x1xf32, #tpu.memory_space<vmem>>, vector<1x1xf32>,
    } else {
    }
    return
  }
  func.func @transform_0(%arg0: i32, %arg1: memref<1xi32, #tpu.memory_space<smem>>) -> (i32, i32) {
    %c0_i32 = arith.constant 0 : i32
    %c0_i32_0 = arith.constant 0 : i32
    return %arg0, %c0_i32 : i32, i32
  }
  func.func @transform_1(%arg0: i32, %arg1: memref<1xi32, #tpu.memory_space<smem>>) -> (i32, i32) {
    %c0_i32 = arith.constant 0 : i32
    %c0_i32_0 = arith.constant 0 : i32
    return %c0_i32, %arg0 : i32, i32
  }
  func.func @transform_2(%arg0: i32, %arg1: memref<1xi32, #tpu.memory_space<smem>>) -> (i32, i32) {
    %c0_i32 = arith.constant 0 : i32
    %c0_i32_0 = arith.constant 0 : i32
    %c0_i32_1 = arith.constant 0 : i32
    return %c0_i32, %c0_i32_0 : i32, i32
  }
}

</mosaic_0001>

<llo_original>
// kernel: tpu_custom_call.1
$region0: #{tpu_custom_call.1}
  #allocation0 [shape = 'u32[]', space=smem, size = 0x4, offset = 0x4, fixed_abs, tag = 'smem constant byte address 0x4 - core index']
  #allocation1 [shape = 'u32[144,128]{1,0:T(1,128)}', space=vmem, size = 0x12000, scoped, tag = 'internal scratch']
  #allocation2 [shape = 'f32[1,1]{1,0:T(1,128)}', space=vmem, size = 0x200, scoped, tag = 'scratch operand']
  #allocation3 [shape = 's32[1]{0}', space=sflag, size = 0x4, scoped, tag = 'scoped memory for tpu_custom_call.1']
  #allocation4 [shape = 's32[1]{0:T(128)S(6)}', space=smem, size = 0x200, scoped, tag = 'prefetched SMEM operand 0']
  %s0 = inlined_call_operand.<no memory space> [shape: s32[1], index: 0, kind: input, shape index: {}]
  %s1 = inlined_call_operand.hbm [shape: f32[8,15], index: 1, kind: input, shape index: {}]
  %s2 = inlined_call_operand.vmem [shape: s32[1,8], index: 2, kind: input, shape index: {}]
  %s3 = inlined_call_operand.hbm [shape: f32[1,1], index: 3, kind: output, shape index: {}]
  %s4 = sld [smem:[#allocation0]]
  $region38: #{tpu_custom_call.1} parent=0
    _
  %s6 = ssub.s32 1, %s4
  %s7 = scalar_select 0, %s6, %s4
  %8 = sst [smem:[#allocation4]] %s0
  $region1: #{tpu_custom_call.1} parent=0
    #allocation5 [shape = 'u8[4096]{0}', space=vmem, size = 0x1000, scoped, tag = 'input window, operand 1, single buffered']
    #allocation6 [shape = 's32[1]{0}', space=sflag, size = 0x4, scoped, tag = 'scoped memory for tpu_custom_call.1']
    #allocation7 [shape = 's32[1]{0}', space=sflag, size = 0x4, scoped, tag = 'scoped memory for tpu_custom_call.1']
    #allocation8 [shape = 'u8[512]{0}', space=vmem, size = 0x400, scoped, tag = 'output window, operand 0, single buffered']
    %9 = vsyncpa [#allocation6], 0
    %10 = vsyncpa [#allocation7], 0
    // Predicated region
    $region2: #{tpu_custom_call.1} parent=1 // pred_check
      _
    $region3: #{tpu_custom_call.1} parent=1 // pred_check_branch
      %12 = sbr.rel (0) target = $region5
    $region4: #{tpu_custom_call.1} parent=1 // pred_region
      %s14 = ssub.s32 128, 128
      %15 = vsyncadd [#allocation6], %s14
      %s17 = sshll.u32 [#allocation5], 4
      %s18 = int_to_ptr.vmem [resolvable:$true] %s17
      %20 = dma.hbm_to_vmem [thread:$0]  %s1, 128, %s18, [#allocation6]
    $region5: #{tpu_custom_call.1} parent=1 // pred_fallthru
      _
    // Predicated region
    $region6: #{tpu_custom_call.1} parent=1 // pred_check
      _
    $region7: #{tpu_custom_call.1} parent=1 // pred_check_branch
      %22 = sbr.rel (0) target = $region9
    $region8: #{tpu_custom_call.1} parent=1 // pred_region
      _
    $region9: #{tpu_custom_call.1} parent=1 // pred_fallthru
      _
    // Predicated region
    $region10: #{tpu_custom_call.1} parent=1 // pred_check
      _
    $region11: #{tpu_custom_call.1} parent=1 // pred_check_branch
      %24 = sbr.rel (0) target = $region13
    $region12: #{tpu_custom_call.1} parent=1 // pred_region
      %25 = dma.done [#allocation6], 128
    $region13: #{tpu_custom_call.1} parent=1 // pred_fallthru
      _
    %p26 = scmp.eq.s32.totalorder 0, 0
    // Predicated region
    $region14: #{tpu_custom_call.1} parent=1 // pred_check
      %p27 = pneg %p26
    $region15: #{tpu_custom_call.1} parent=1 // pred_check_branch
      %29 = sbr.rel (%p27) target = $region17
    $region16: #{tpu_custom_call.1} parent=1 // pred_region
      %vm30 = vcmask 0
      %31 = vst.msk [vmem:[#allocation2] sm:$0x1] %vm30, 0.0
    $region17: #{tpu_custom_call.1} parent=1 // pred_fallthru
      _
    %v32 = vld [vmem:[#allocation5] sm:$0xff]
    %33 = vxpose.xlu0.b32.start [1/16] %v32, 128
    %34 = vxpose.xlu0.b32.cont [2/16] 0.0, 128
    %35 = vxpose.xlu0.b32.cont [3/16] 0.0, 128
    %36 = vxpose.xlu0.b32.cont [4/16] 0.0, 128
    %37 = vxpose.xlu0.b32.cont [5/16] 0.0, 128
    %38 = vxpose.xlu0.b32.cont [6/16] 0.0, 128
    %39 = vxpose.xlu0.b32.cont [7/16] 0.0, 128
    %40 = vxpose.xlu0.b32.cont [8/16] 0.0, 128
    %41 = vxpose.xlu0.b32.cont [9/16] 0.0, 128
    %42 = vxpose.xlu0.b32.cont [10/16] 0.0, 128
    %43 = vxpose.xlu0.b32.cont [11/16] 0.0, 128
    %44 = vxpose.xlu0.b32.cont [12/16] 0.0, 128
    %45 = vxpose.xlu0.b32.cont [13/16] 0.0, 128
    %46 = vxpose.xlu0.b32.cont [14/16] 0.0, 128
    %47 = vxpose.xlu0.b32.cont [15/16] 0.0, 128
    %48 = vxpose.xlu0.b32.end [16/16] 0.0, 128
    %v49 = vpop.trf.xlu0
    %v50 = vpop.trf.xlu0
    %v51 = vpop.trf.xlu0
    %v52 = vpop.trf.xlu0
    %v53 = vpop.trf.xlu0
    %v54 = vpop.trf.xlu0
    %v55 = vpop.trf.xlu0
    %v56 = vpop.trf.xlu0
    %v57 = vpop.trf.xlu0
    %v58 = vpop.trf.xlu0
    %v59 = vpop.trf.xlu0
    %v60 = vpop.trf.xlu0
    %v61 = vpop.trf.xlu0
    %v62 = vpop.trf.xlu0
    %v63 = vpop.trf.xlu0
    %v64 = vpop.trf.xlu0
    %v65 = vld [vmem:[%s2] sm:$0x1]
    %vm66 = vcmask 64512
    %v67 = vsel %vm66, %v49, -inf
    %vm68 = vcmask 63488
    %v69 = vsel %vm68, %v50, -inf
    %v70 = vmax.f32 %v67, %v69
    %v71 = vrot.slane %v70, 4
    %v72 = vmax.f32 %v70, %v71
    %v73 = vrot.slane %v72, 2
    %v74 = vmax.f32 %v72, %v73
    %v75 = vrot.slane %v74, 1
    %v76 = vmax.f32 %v74, %v75
    %v77 = vsub.f32 %v49, %v76
    %v78 = vsub.f32 %v50, %v76
    %v79 = vmul.f32 %v77, 1.442695
    %v80 = vpow.pop %v79
    %v81 = vmul.f32 %v78, 1.442695
    %v82 = vpow.pop %v81
    %v83 = vsel %vm66, %v80, 0.0
    %v84 = vsel %vm68, %v82, 0.0
    %v85 = vadd.f32 %v83, %v84
    %v86 = vrot.slane %v85, 4
    %v87 = vadd.f32 %v85, %v86
    %v88 = vrot.slane %v87, 2
    %v89 = vadd.f32 %v87, %v88
    %v90 = vrot.slane %v89, 1
    %v91 = vadd.f32 %v89, %v90
    %v92 = vlog2.pop %v91
    %v93 = vmul.f32 %v92, 0.6931472
    %v94 = vlaneseq
    %v95 = vshrl.u32 %v94, 7
    %v96 = vadd.s32 %v95, 8
    %v97 = vlaneseq
    %v98 = vshrl.u32 %v97, 7
    %v99 = vsub.s32 0, %v98
    %v100 = vrot.slane %v65, %v99
    %vm101 = vcmp.eq.s32.totalorder %v95, %v100
    %vm102 = vcmp.eq.s32.totalorder %v96, %v100
    %v103 = vsel %vm101, 0.9, 0.007142857
    %v104 = vsel %vm102, 0.9, 0.007142857
    %v105 = vmul.f32 %v103, %v77
    %v106 = vmul.f32 %v104, %v78
    %v107 = vsel %vm66, %v105, 0.0
    %v108 = vsel %vm68, %v106, 0.0
    %v109 = vadd.f32 %v107, %v108
    %v110 = vrot.slane %v109, 4
    %v111 = vadd.f32 %v109, %v110
    %v112 = vrot.slane %v111, 2
    %v113 = vadd.f32 %v111, %v112
    %v114 = vrot.slane %v113, 1
    %v115 = vadd.f32 %v113, %v114
    %v116 = vsub.f32 %v93, %v115
    %s117 = sld [smem:[#allocation4]]
    %s118 = smul.u32 0, 8
    %s119 = ssub.s32 %s117, %s118
    %p120 = scmp.ge.s32.totalorder %s119, 8
    // Predicated region
    $region18: #{tpu_custom_call.1} parent=1 // pred_check
      %p121 = pneg %p120
    $region19: #{tpu_custom_call.1} parent=1 // pred_check_branch
      %123 = sbr.rel (%p121) target = $region21
    $region20: #{tpu_custom_call.1} parent=1 // pred_region
      %v124 = vld [vmem:[#allocation2] sm:$0x1]
      %v125 = vsel %vm66, %v116, 0.0
      %126 = vadd.xlane.f32.xlu0 %v125
      %v127 = vpop.xlane.xlu0 %126
      %v128 = vadd.f32 %v124, %v127
      %vm129 = vcmask 0
      %130 = vst.msk [vmem:[#allocation2] sm:$0x1] %vm129, %v128
    $region21: #{tpu_custom_call.1} parent=1 // pred_fallthru
      _
    %p131 = scmp.lt.s32.totalorder %s119, 8
    // Predicated region
    $region22: #{tpu_custom_call.1} parent=1 // pred_check
      %p132 = pneg %p131
    $region23: #{tpu_custom_call.1} parent=1 // pred_check_branch
      %134 = sbr.rel (%p132) target = $region25
    $region24: #{tpu_custom_call.1} parent=1 // pred_region
      %v135 = vlaneseq
      %v136 = vand.u32 %v135, 127
      %v137 = vstv %s119
      %vm138 = vcmp.lt.s32.totalorder %v136, %v137
      %v139 = vsel %vm138, %v116, 0.0
      %v140 = vld [vmem:[#allocation2] sm:$0x1]
      %v141 = vsel %vm66, %v139, 0.0
      %142 = vadd.xlane.f32.xlu0 %v141
      %v143 = vpop.xlane.xlu0 %142
      %v144 = vadd.f32 %v140, %v143
      %vm145 = vcmask 0
      %146 = vst.msk [vmem:[#allocation2] sm:$0x1] %vm145, %v144
    $region25: #{tpu_custom_call.1} parent=1 // pred_fallthru
      _
    // Predicated region
    $region26: #{tpu_custom_call.1} parent=1 // pred_check
      %p147 = pneg %p26
    $region27: #{tpu_custom_call.1} parent=1 // pred_check_branch
      %149 = sbr.rel (%p147) target = $region29
    $region28: #{tpu_custom_call.1} parent=1 // pred_region
      %v150 = vld [vmem:[#allocation2] sm:$0x1]
      %s151 = sld [smem:[#allocation4]]
      %s152 = scvt.s32.f32 %s151
      %v153 = vstv %s152
      %v154 = vrcp.pop %v153
      %v155 = vmul.f32 %v150, %v154
      %vm156 = vcmask 0
      %157 = vst.msk [vmem:[#allocation8] sm:$0x1] %vm156, %v155
    $region29: #{tpu_custom_call.1} parent=1 // pred_fallthru
      _
    // Predicated region
    $region30: #{tpu_custom_call.1} parent=1 // pred_check
      _
    $region31: #{tpu_custom_call.1} parent=1 // pred_check_branch
      %159 = sbr.rel (0) target = $region33
    $region32: #{tpu_custom_call.1} parent=1 // pred_region
      %s161 = ssub.s32 16, 16
      %162 = vsyncadd [#allocation7], %s161
      %s164 = sshll.u32 [#allocation8], 4
      %s165 = int_to_ptr.vmem [resolvable:$true] %s164
      %167 = dma.vmem_to_hbm [thread:$0]  %s165, 16, %s3, [#allocation7]
    $region33: #{tpu_custom_call.1} parent=1 // pred_fallthru
      _
    // Predicated region
    $region34: #{tpu_custom_call.1} parent=1 // pred_check
      _
    $region35: #{tpu_custom_call.1} parent=1 // pred_check_branch
      %169 = sbr.rel (0) target = $region37
    $region36: #{tpu_custom_call.1} parent=1 // pred_region
      %170 = dma.done [#allocation7], 16
    $region37: #{tpu_custom_call.1} parent=1 // pred_fallthru
      _
    %171 = vsyncpa [#allocation6], 1
    %172 = vsyncpa [#allocation7], 1

</llo_original>
